<compile_context>
chip_gen: v5e
topology: v5e:2x2
jax: 0.10.0
libtpu: 0.0.40
codegen_flags: <defaults>
</compile_context>

<pallas_src>
import jax
import jax.numpy as jnp
from jax.experimental import pallas as pl
from jax.experimental.pallas import tpu as pltpu  # noqa: F401  (TPU backend)


def community_kernel(feat_ref, w_ref, mean_p_ref, logvar_p_ref, noise_ref, out_ref):
    # temp = tanh(feature @ W_ini)                         [N, D]
    temp = jnp.tanh(
        jnp.dot(feat_ref[...], w_ref[...], preferred_element_type=jnp.float32)
    )
    # mean = tanh(mean_p @ temp);  log_vars = tanh(logvar_p @ temp)   [K, D]
    mean = jnp.tanh(
        jnp.dot(mean_p_ref[...], temp, preferred_element_type=jnp.float32)
    )
    log_vars = jnp.tanh(
        jnp.dot(logvar_p_ref[...], temp, preferred_element_type=jnp.float32)
    )
    # community = tanh(mean + noise * exp(log_vars / 2))
    out_ref[...] = jnp.tanh(
        mean + noise_ref[...] * jnp.exp(log_vars * 0.5)
    ).astype(out_ref.dtype)


def _full_spec(shape):
    # Full-array block: block == array, index_map returns the (only) block.
    return pl.BlockSpec(shape, lambda: (0,) * len(shape))


@jax.jit
def community_forward(feature, w_ini, mean_p, logvar_p, noise):
    N, D = feature.shape
    K = mean_p.shape[0]
    return pl.pallas_call(
        community_kernel,
        out_shape=jax.ShapeDtypeStruct((K, D), jnp.float32),
        grid=(),
        in_specs=[
            _full_spec(feature.shape),   # [N, D]
            _full_spec(w_ini.shape),     # [D, D]
            _full_spec(mean_p.shape),    # [K, N]
            _full_spec(logvar_p.shape),  # [K, N]
            _full_spec(noise.shape),     # [K, D]
        ],
        out_specs=_full_spec((K, D)),
    )(feature, w_ini, mean_p, logvar_p, noise)


def xavier_normal(key, shape, gain=1.0):
    fan_out, fan_in = shape[0], shape[1]
    std = gain * (2.0 / (fan_in + fan_out)) ** 0.5
    return std * jax.random.normal(key, shape, dtype=jnp.float32)


def reference_forward(feature, w_ini, mean_p, logvar_p, noise):
    temp = jnp.tanh(feature @ w_ini)
    mean = jnp.tanh(mean_p @ temp)
    log_vars = jnp.tanh(logvar_p @ temp)
    return jnp.tanh(mean + noise * jnp.exp(log_vars / 2.0))


if __name__ == "__main__":
    num_nodes, K, out_dim = 16, 8, 32

    key = jax.random.PRNGKey(0)
    k_w, k_m, k_v, k_f, k_n = jax.random.split(key, 5)

    # Deterministic parameter init (xavier_normal_, gain=1), matching the
    # shapes in Community.__init__.
    w_ini = xavier_normal(k_w, (out_dim, out_dim))
    mean_p = xavier_normal(k_m, (K, num_nodes))
    logvar_p = xavier_normal(k_v, (K, num_nodes))

    # Example `feature` input and the gaussian noise used in the
    # reparameterization (replaces torch.randn(K, out_dim)).
    feature = jax.random.normal(k_f, (num_nodes, out_dim), dtype=jnp.float32)
    noise = jax.random.normal(k_n, (K, out_dim), dtype=jnp.float32)

    out = community_forward(feature, w_ini, mean_p, logvar_p, noise)
    out = jax.block_until_ready(out)

    ref = reference_forward(feature, w_ini, mean_p, logvar_p, noise)
    assert out.shape == (K, out_dim)
    assert jnp.allclose(out, ref, atol=1e-5, rtol=1e-5)

    print("KERNEL_OK")
</pallas_src>

<mosaic_0001>
module attributes {stable_mosaic.version = 11 : i64} {
  func.func @community_kernel(%arg0: memref<16x32xf32, #tpu.memory_space<vmem>>, %arg1: memref<32x32xf32, #tpu.memory_space<vmem>>, %arg2: memref<8x16xf32, #tpu.memory_space<vmem>>, %arg3: memref<8x16xf32, #tpu.memory_space<vmem>>, %arg4: memref<8x32xf32, #tpu.memory_space<vmem>>, %arg5: memref<8x32xf32, #tpu.memory_space<vmem>>) attributes {dimension_semantics = [], scalar_prefetch = 0 : i64, scratch_operands = 0 : i64, tpu.core_type = #tpu.core_type<tc>} {
    %c0 = arith.constant 0 : index
    %c0_0 = arith.constant 0 : index
    %0 = vector.load %arg0[%c0, %c0_0] : memref<16x32xf32, #tpu.memory_space<vmem>>, vector<16x32xf32>
    %c0_1 = arith.constant 0 : index
    %c0_2 = arith.constant 0 : index
    %1 = vector.load %arg1[%c0_1, %c0_2] : memref<32x32xf32, #tpu.memory_space<vmem>>, vector<32x32xf32>
    %cst = arith.constant dense<0.000000e+00> : vector<16x32xf32>
    %2 = tpu.matmul %0, %1, %cst {dimension_numbers = #tpu.dot_dimension_numbers<[1], [0], [0], [1], [0, 0, 1, 1], [], []>} : vector<16x32xf32>, vector<32x32xf32>, vector<16x32xf32> -> vector<16x32xf32>
    %3 = math.tanh %2 : vector<16x32xf32>
    %c0_3 = arith.constant 0 : index
    %c0_4 = arith.constant 0 : index
    %4 = vector.load %arg2[%c0_3, %c0_4] : memref<8x16xf32, #tpu.memory_space<vmem>>, vector<8x16xf32>
    %cst_5 = arith.constant dense<0.000000e+00> : vector<8x32xf32>
    %5 = tpu.matmul %4, %3, %cst_5 {dimension_numbers = #tpu.dot_dimension_numbers<[1], [0], [0], [1], [0, 0, 1, 1], [], []>} : vector<8x16xf32>, vector<16x32xf32>, vector<8x32xf32> -> vector<8x32xf32>
    %6 = math.tanh %5 : vector<8x32xf32>
    %c0_6 = arith.constant 0 : index
    %c0_7 = arith.constant 0 : index
    %7 = vector.load %arg3[%c0_6, %c0_7] : memref<8x16xf32, #tpu.memory_space<vmem>>, vector<8x16xf32>
    %cst_8 = arith.constant dense<0.000000e+00> : vector<8x32xf32>
    %8 = tpu.matmul %7, %3, %cst_8 {dimension_numbers = #tpu.dot_dimension_numbers<[1], [0], [0], [1], [0, 0, 1, 1], [], []>} : vector<8x16xf32>, vector<16x32xf32>, vector<8x32xf32> -> vector<8x32xf32>
    %9 = math.tanh %8 : vector<8x32xf32>
    %c0_9 = arith.constant 0 : index
    %c0_10 = arith.constant 0 : index
    %10 = vector.load %arg4[%c0_9, %c0_10] : memref<8x32xf32, #tpu.memory_space<vmem>>, vector<8x32xf32>
    %cst_11 = arith.constant 5.000000e-01 : f32
    %11 = vector.broadcast %cst_11 : f32 to vector<8x32xf32>
    %12 = arith.mulf %9, %11 : vector<8x32xf32>
    %13 = math.exp %12 : vector<8x32xf32>
    %14 = arith.mulf %10, %13 : vector<8x32xf32>
    %15 = arith.addf %6, %14 : vector<8x32xf32>
    %16 = math.tanh %15 : vector<8x32xf32>
    %c0_12 = arith.constant 0 : index
    %c0_13 = arith.constant 0 : index
    %17 = vector.load %arg5[%c0_12, %c0_13] : memref<8x32xf32, #tpu.memory_space<vmem>>, vector<8x32xf32>
    tpu.vector_store %arg5[%c0_12, %c0_13], %16 {strides = array<i32>} : memref<8x32xf32, #tpu.memory_space<vmem>>, vector<8x32xf32>,
    return
  }
}

</mosaic_0001>

<llo_original>
// kernel: community_forward.1
$region0: #{community_forward.1}
  #allocation0 [shape = 'u32[]', space=smem, size = 0x4, offset = 0x4, fixed_abs, tag = 'smem constant byte address 0x4 - core index']
  #allocation1 [shape = 'u32[72,128]{1,0:T(1,128)}', space=vmem, size = 0x9000, scoped, tag = 'internal scratch']
  %s0 = inlined_call_operand.hbm [shape: f32[16,32], index: 0, kind: input, shape index: {}]
  %s1 = inlined_call_operand.hbm [shape: f32[32,32], index: 1, kind: input, shape index: {}]
  %s2 = inlined_call_operand.hbm [shape: f32[8,16], index: 2, kind: input, shape index: {}]
  %s3 = inlined_call_operand.hbm [shape: f32[8,16], index: 3, kind: input, shape index: {}]
  %s4 = inlined_call_operand.hbm [shape: f32[8,32], index: 4, kind: input, shape index: {}]
  %s5 = inlined_call_operand.hbm [shape: f32[8,32], index: 5, kind: output, shape index: {}]
  %s6 = sld [smem:[#allocation0]]
  $region50: #{community_forward.1} parent=0
    _
  %s8 = ssub.s32 1, %s6
  %s9 = scalar_select 0, %s8, %s6
  $region1: #{community_forward.1} parent=0
    #allocation2 [shape = 'u8[8192]{0}', space=vmem, size = 0x2000, scoped, tag = 'input window, operand 0, single buffered']
    #allocation3 [shape = 's32[1]{0}', space=sflag, size = 0x4, scoped, tag = 'scoped memory for community_forward.1']
    #allocation4 [shape = 's32[1]{0}', space=sflag, size = 0x4, scoped, tag = 'scoped memory for community_forward.1']
    #allocation5 [shape = 'u8[16384]{0}', space=vmem, size = 0x4000, scoped, tag = 'input window, operand 1, single buffered']
    #allocation6 [shape = 's32[1]{0}', space=sflag, size = 0x4, scoped, tag = 'scoped memory for community_forward.1']
    #allocation7 [shape = 'u8[4096]{0}', space=vmem, size = 0x1000, scoped, tag = 'input window, operand 2, single buffered']
    #allocation8 [shape = 'u8[4096]{0}', space=vmem, size = 0x1000, scoped, tag = 'input window, operand 3, single buffered']
    #allocation9 [shape = 's32[1]{0}', space=sflag, size = 0x4, scoped, tag = 'scoped memory for community_forward.1']
    #allocation10 [shape = 'u8[4096]{0}', space=vmem, size = 0x1000, scoped, tag = 'input window, operand 4, single buffered']
    #allocation11 [shape = 'u8[4096]{0}', space=vmem, size = 0x1000, scoped, tag = 'output window, operand 0, single buffered']
    %10 = vsyncpa [#allocation3], 0
    %11 = vsyncpa [#allocation6], 0
    %12 = vsyncpa [#allocation9], 0
    %13 = vsyncpa [#allocation4], 0
    // Predicated region
    $region2: #{community_forward.1} parent=1 // pred_check
      _
    $region3: #{community_forward.1} parent=1 // pred_check_branch
      %15 = sbr.rel (0) target = $region5
    $region4: #{community_forward.1} parent=1 // pred_region
      %17 = vsyncadd [#allocation3], 0
      %s18 = sshll.u32 %s0, 4
      %s19 = int_to_ptr.hbm [resolvable:$true] %s18
      %s20 = sshll.u32 [#allocation2], 4
      %s21 = int_to_ptr.vmem [resolvable:$true] %s20
      %26 = dma.hbm_to_vmem [thread:$0]  %s19, 256, %s21, [#allocation3], 128, 128, 8
    $region5: #{community_forward.1} parent=1 // pred_fallthru
      _
    // Predicated region
    $region6: #{community_forward.1} parent=1 // pred_check
      _
    $region7: #{community_forward.1} parent=1 // pred_check_branch
      %28 = sbr.rel (0) target = $region9
    $region8: #{community_forward.1} parent=1 // pred_region
      %30 = vsyncadd [#allocation6], 0
      %s31 = sshll.u32 %s1, 4
      %s32 = int_to_ptr.hbm [resolvable:$true] %s31
      %s33 = sshll.u32 [#allocation5], 4
      %s34 = int_to_ptr.vmem [resolvable:$true] %s33
      %39 = dma.hbm_to_vmem [thread:$0]  %s32, 512, %s34, [#allocation6], 128, 128, 8
    $region9: #{community_forward.1} parent=1 // pred_fallthru
      _
    // Predicated region
    $region10: #{community_forward.1} parent=1 // pred_check
      _
    $region11: #{community_forward.1} parent=1 // pred_check_branch
      %41 = sbr.rel (0) target = $region13
    $region12: #{community_forward.1} parent=1 // pred_region
      %43 = vsyncadd [#allocation6], 0
      %s45 = sshll.u32 %s2, 4
      %s46 = int_to_ptr.hbm [resolvable:$true] %s45
      %s47 = sshll.u32 [#allocation7], 4
      %s48 = int_to_ptr.vmem [resolvable:$true] %s47
      %50 = dma.hbm_to_vmem [thread:$0]  %s46, 128, %s48, [#allocation6]
    $region13: #{community_forward.1} parent=1 // pred_fallthru
      _
    // Predicated region
    $region14: #{community_forward.1} parent=1 // pred_check
      _
    $region15: #{community_forward.1} parent=1 // pred_check_branch
      %52 = sbr.rel (0) target = $region17
    $region16: #{community_forward.1} parent=1 // pred_region
      %54 = vsyncadd [#allocation9], 0
      %s56 = sshll.u32 %s3, 4
      %s57 = int_to_ptr.hbm [resolvable:$true] %s56
      %s58 = sshll.u32 [#allocation8], 4
      %s59 = int_to_ptr.vmem [resolvable:$true] %s58
      %61 = dma.hbm_to_vmem [thread:$0]  %s57, 128, %s59, [#allocation9]
    $region17: #{community_forward.1} parent=1 // pred_fallthru
      _
    // Predicated region
    $region18: #{community_forward.1} parent=1 // pred_check
      _
    $region19: #{community_forward.1} parent=1 // pred_check_branch
      %63 = sbr.rel (0) target = $region21
    $region20: #{community_forward.1} parent=1 // pred_region
      %65 = vsyncadd [#allocation9], 0
      %s67 = sshll.u32 %s4, 4
      %s68 = int_to_ptr.hbm [resolvable:$true] %s67
      %s69 = sshll.u32 [#allocation10], 4
      %s70 = int_to_ptr.vmem [resolvable:$true] %s69
      %72 = dma.hbm_to_vmem [thread:$0]  %s68, 128, %s70, [#allocation9]
    $region21: #{community_forward.1} parent=1 // pred_fallthru
      _
    // Predicated region
    $region22: #{community_forward.1} parent=1 // pred_check
      _
    $region23: #{community_forward.1} parent=1 // pred_check_branch
      %74 = sbr.rel (0) target = $region25
    $region24: #{community_forward.1} parent=1 // pred_region
      %76 = dma.done [#allocation3], 256
    $region25: #{community_forward.1} parent=1 // pred_fallthru
      _
    // Predicated region
    $region26: #{community_forward.1} parent=1 // pred_check
      _
    $region27: #{community_forward.1} parent=1 // pred_check_branch
      %78 = sbr.rel (0) target = $region29
    $region28: #{community_forward.1} parent=1 // pred_region
      %80 = dma.done [#allocation6], 512
    $region29: #{community_forward.1} parent=1 // pred_fallthru
      _
    // Predicated region
    $region30: #{community_forward.1} parent=1 // pred_check
      _
    $region31: #{community_forward.1} parent=1 // pred_check_branch
      %82 = sbr.rel (0) target = $region33
    $region32: #{community_forward.1} parent=1 // pred_region
      %84 = dma.done [#allocation6], 128
    $region33: #{community_forward.1} parent=1 // pred_fallthru
      _
    // Predicated region
    $region34: #{community_forward.1} parent=1 // pred_check
      _
    $region35: #{community_forward.1} parent=1 // pred_check_branch
      %86 = sbr.rel (0) target = $region37
    $region36: #{community_forward.1} parent=1 // pred_region
      %88 = dma.done [#allocation9], 128
    $region37: #{community_forward.1} parent=1 // pred_fallthru
      _
    // Predicated region
    $region38: #{community_forward.1} parent=1 // pred_check
      _
    $region39: #{community_forward.1} parent=1 // pred_check_branch
      %90 = sbr.rel (0) target = $region41
    $region40: #{community_forward.1} parent=1 // pred_region
      %92 = dma.done [#allocation9], 128
    $region41: #{community_forward.1} parent=1 // pred_fallthru
      _
    %v93 = vld [vmem:[#allocation2] sm:$0xff]
    %v94 = vld [vmem:[#allocation2 + $0x8] sm:$0xff]
    %v95 = vld [vmem:[#allocation5] sm:$0xff]
    %v96 = vld [vmem:[#allocation5 + $0x8] sm:$0xff]
    %v97 = vld [vmem:[#allocation5 + $0x10] sm:$0xff]
    %v98 = vld [vmem:[#allocation5 + $0x18] sm:$0xff]
    %vm99 = vcmask 261120
    %v101 = vsel %vm99, %v93, 0
    %v104 = vsel %vm99, %v94, 0
    %106 = vmatpush.msra.mxu0 0.0
    %107 = vmatpush.msra.mxu0 0.0
    %108 = vmatpush.msra.mxu0 0.0
    %109 = vmatpush.msra.mxu0 0.0
    %110 = vmatpush.msra.mxu0 0.0
    %111 = vmatpush.msra.mxu0 0.0
    %112 = vmatpush.msra.mxu0 0.0
    %113 = vmatpush.msra.mxu0 0.0
    %114 = vmatpush.msra.mxu0 0.0
    %115 = vmatpush.msra.mxu0 0.0
    %116 = vmatpush.msra.mxu0 0.0
    %117 = vmatpush.msra.mxu0 0.0
    %118 = vmatpush.msra.mxu0 %v98
    %119 = vmatpush.msra.mxu0 %v97
    %120 = vmatpush.msra.mxu0 %v96
    %121 = vmatpush.msra.mxu0 %v95
    %122 = vmatmul.f32.gmra.mxu0 %v101
    %v123 = vpop.f32.mrf.mxu0
    %v124 = vadd.f32 0.0, %v123
    %125 = vmatmul.f32.gmra.mxu0 %v104
    %v126 = vpop.f32.mrf.mxu0
    %v127 = vadd.f32 0.0, %v126
    %128 = vdwg.mxu0
    %v129 = vtanh.pop %v124
    %v130 = vtanh.pop %v127
    %v131 = vld [vmem:[#allocation7] sm:$0xff]
    %vm132 = vcmask 130048
    %v134 = vsel %vm132, %v131, 0
    %136 = vmatpush.msra.mxu0 0.0
    %137 = vmatpush.msra.mxu0 0.0
    %138 = vmatpush.msra.mxu0 0.0
    %139 = vmatpush.msra.mxu0 0.0
    %140 = vmatpush.msra.mxu0 0.0
    %141 = vmatpush.msra.mxu0 0.0
    %142 = vmatpush.msra.mxu0 0.0
    %143 = vmatpush.msra.mxu0 0.0
    %144 = vmatpush.msra.mxu0 0.0
    %145 = vmatpush.msra.mxu0 0.0
    %146 = vmatpush.msra.mxu0 0.0
    %147 = vmatpush.msra.mxu0 0.0
    %148 = vmatpush.msra.mxu0 0.0
    %149 = vmatpush.msra.mxu0 0.0
    %150 = vmatpush.msra.mxu0 %v130
    %151 = vmatpush.msra.mxu0 %v129
    %152 = vmatmul.f32.gmra.mxu0 %v134
    %v153 = vpop.f32.mrf.mxu0
    %v154 = vadd.f32 0.0, %v153
    %155 = vdwg.mxu0
    %v156 = vtanh.pop %v154
    %v157 = vld [vmem:[#allocation8] sm:$0xff]
    %v159 = vsel %vm132, %v157, 0
    %161 = vmatpush.msra.mxu0 0.0
    %162 = vmatpush.msra.mxu0 0.0
    %163 = vmatpush.msra.mxu0 0.0
    %164 = vmatpush.msra.mxu0 0.0
    %165 = vmatpush.msra.mxu0 0.0
    %166 = vmatpush.msra.mxu0 0.0
    %167 = vmatpush.msra.mxu0 0.0
    %168 = vmatpush.msra.mxu0 0.0
    %169 = vmatpush.msra.mxu0 0.0
    %170 = vmatpush.msra.mxu0 0.0
    %171 = vmatpush.msra.mxu0 0.0
    %172 = vmatpush.msra.mxu0 0.0
    %173 = vmatpush.msra.mxu0 0.0
    %174 = vmatpush.msra.mxu0 0.0
    %175 = vmatpush.msra.mxu0 %v130
    %176 = vmatpush.msra.mxu0 %v129
    %177 = vmatmul.f32.gmra.mxu0 %v159
    %v178 = vpop.f32.mrf.mxu0
    %v179 = vadd.f32 0.0, %v178
    %180 = vdwg.mxu0
    %v181 = vtanh.pop %v179
    %v182 = vld [vmem:[#allocation10] sm:$0xff]
    %v183 = vmul.f32 %v181, 0.5
    %v184 = vmul.f32 %v183, 1.442695
    %v185 = vpow.pop %v184
    %v186 = vmul.f32 %v182, %v185
    %v187 = vadd.f32 %v156, %v186
    %v188 = vtanh.pop %v187
    %189 = vst.msk [vmem:[#allocation11] sm:$0xff] %vm99, %v188
    // Predicated region
    $region42: #{community_forward.1} parent=1 // pred_check
      _
    $region43: #{community_forward.1} parent=1 // pred_check_branch
      %191 = sbr.rel (0) target = $region45
    $region44: #{community_forward.1} parent=1 // pred_region
      %193 = vsyncadd [#allocation4], 0
      %s195 = sshll.u32 [#allocation11], 4
      %s196 = int_to_ptr.vmem [resolvable:$true] %s195
      %s197 = sshll.u32 %s5, 4
      %s198 = int_to_ptr.hbm [resolvable:$true] %s197
      %200 = dma.vmem_to_hbm [thread:$0]  %s196, 128, %s198, [#allocation4]
    $region45: #{community_forward.1} parent=1 // pred_fallthru
      _
    // Predicated region
    $region46: #{community_forward.1} parent=1 // pred_check
      _
    $region47: #{community_forward.1} parent=1 // pred_check_branch
      %202 = sbr.rel (0) target = $region49
    $region48: #{community_forward.1} parent=1 // pred_region
      %204 = dma.done [#allocation4], 128
    $region49: #{community_forward.1} parent=1 // pred_fallthru
      _
    %205 = vsyncpa [#allocation3], 1
    %206 = vsyncpa [#allocation6], 1
    %207 = vsyncpa [#allocation9], 1
    %208 = vsyncpa [#allocation4], 1

</llo_original>
